<compile_context>
chip_gen: v5e
topology: v5e:2x2
jax: 0.10.0
libtpu: 0.0.40
codegen_flags: <defaults>
</compile_context>

<pallas_src>
import math

import jax
import jax.numpy as jnp
from jax.experimental import pallas as pl
from jax.experimental.pallas import tpu as pltpu

_KER = 31
_PAD = 15
_NC = 2  # outer "parallel" grid split (v7x dual TensorCore); harmless on 1-TC chips


def _band(n, dtype=jnp.float32):
    i = jnp.arange(n)[:, None]
    j = jnp.arange(n)[None, :]
    return (jnp.abs(i - j) <= _PAD).astype(dtype)


def _choose_gblk(G, H, W):
    """Planes per grid step: fill the MXU M-dim while staying VMEM-friendly."""
    target_rows = 256                                   # ~fill a 256-wide MXU in M
    vmem_cap = max(1, (1 << 17) // max(H * W, 1))       # <=512KiB per f32 operand block
    gblk = min(max(1, -(-target_rows // H)), vmem_cap)
    gblk = max(1, min(gblk, -(-G // _NC)))              # don't over-pad tiny batches
    align = 8 // math.gcd(H, 8)                         # keep Gblk*H a multiple of 8
    gblk = -(-gblk // align) * align
    return gblk


def structure_loss(pred, mask):
    """pred, mask: (B, C, H, W) arrays (pred = logits). Returns scalar f32 loss."""
    B, C, H, W = pred.shape
    G = B * C
    gblk = _choose_gblk(G, H, W)
    GH = gblk * H

    nb_total = -(-G // gblk)
    nb_core = -(-nb_total // _NC)       # sequential ("arbitrary") steps per core
    G_pad = _NC * nb_core * gblk

    pred_p = pred.reshape(G, H, W).astype(jnp.float32)
    mask_p = mask.reshape(G, H, W).astype(jnp.float32)
    if G_pad > G:
        pad = ((0, G_pad - G), (0, 0), (0, 0))
        pred_p = jnp.pad(pred_p, pad)
        mask_p = jnp.pad(mask_p, pad)
    pred_f = pred_p.reshape(G_pad * H, W)
    mask_f = mask_p.reshape(G_pad * H, W)

    # Hoisted constants (built once; constant index_map keeps them VMEM-resident).
    # bf16 band operands are exact for {0,1} masks (integer partial sums <= 961).
    a_w = _band(W, jnp.bfloat16)                                      # (W, W)
    a_gh = jnp.kron(jnp.eye(gblk, dtype=jnp.float32),
                    _band(H, jnp.float32)).astype(jnp.bfloat16)       # (GH, GH)
    sind = jnp.repeat(jnp.eye(gblk, dtype=jnp.float32), H, axis=1)    # (gblk, GH)

    total_elems = float(G * H * W)
    num_planes = float(G)
    inv_k2 = 1.0 / float(_KER * _KER)

    def kernel(pred_ref, mask_ref, agh_ref, aw_ref, sind_ref, out_ref,
               bce_acc, wiou_acc):
        c = pl.program_id(0)
        i = pl.program_id(1)

        @pl.when(i == 0)
        def _init():
            bce_acc[...] = jnp.zeros_like(bce_acc)
            wiou_acc[...] = jnp.zeros_like(wiou_acc)

        x = pred_ref[...]                      # (GH, W) logits, f32
        m = mask_ref[...]                      # (GH, W) targets, f32

        # ---- 31x31 avg_pool (stride 1, pad 15, count_include_pad=True) ------
        t = jnp.dot(m.astype(jnp.bfloat16), aw_ref[...],
                    preferred_element_type=jnp.float32)               # (GH, W)
        boxsum = jnp.dot(agh_ref[...], t.astype(jnp.bfloat16),
                         preferred_element_type=jnp.float32)          # (GH, W)
        weit = 1.0 + 5.0 * jnp.abs(boxsum * inv_k2 - m)

        # ---- elementwise stage (f32); share exp(-|x|) for BCE and sigmoid ---
        e = jnp.exp(-jnp.abs(x))                                      # one EUP exp
        bce = jnp.maximum(x, 0.0) - x * m + jnp.log(1.0 + e)
        r = 1.0 / (1.0 + e)                                           # one reciprocal
        p = jnp.where(x >= 0.0, r, e * r)                             # sigmoid(x)

        # validity of (possibly zero-padded) planes in this block
        first_plane = (c * nb_core + i) * gblk
        row = jax.lax.broadcasted_iota(jnp.int32, (GH, 1), 0)
        valid_row = ((first_plane * H + row) < G * H).astype(jnp.float32)
        gidx = jax.lax.broadcasted_iota(jnp.int32, (gblk, 1), 0)
        valid_plane = (first_plane + gidx) < G                        # (gblk, 1)

        # global-mean BCE partial sum (torch reduce='none' -> reduction='mean')
        bce_acc[...] += jnp.sum(bce * valid_row, keepdims=True)       # (1, 1)

        # per-plane weighted IoU; plane sums via plane-indicator matmul
        # (keeps everything 2-D: no in-kernel reshape/transpose).
        inter = jnp.sum(jnp.dot(sind_ref[...], p * m * weit,
                                preferred_element_type=jnp.float32),
                        axis=1, keepdims=True)                        # (gblk, 1)
        union = jnp.sum(jnp.dot(sind_ref[...], (p + m) * weit,
                                preferred_element_type=jnp.float32),
                        axis=1, keepdims=True)                        # (gblk, 1)
        wiou = 1.0 - inter / (union - inter)
        wiou_acc[...] += jnp.sum(jnp.where(valid_plane, wiou, 0.0),
                                 keepdims=True)                       # (1, 1)

        @pl.when(i == pl.num_programs(1) - 1)
        def _fini():
            part = (bce_acc[...] * (1.0 / total_elems)
                    + wiou_acc[...] * (1.0 / num_planes))             # (1, 1)
            out_ref[...] = jnp.broadcast_to(part, out_ref.shape)      # lane-dense

    out = pl.pallas_call(
        kernel,
        out_shape=jax.ShapeDtypeStruct((_NC * 8, 128), jnp.float32),
        grid_spec=pltpu.PrefetchScalarGridSpec(
            num_scalar_prefetch=0,
            grid=(_NC, nb_core),
            in_specs=[
                pl.BlockSpec((GH, W), lambda c, i: (c * nb_core + i, 0)),
                pl.BlockSpec((GH, W), lambda c, i: (c * nb_core + i, 0)),
                pl.BlockSpec((GH, GH), lambda c, i: (0, 0)),
                pl.BlockSpec((W, W), lambda c, i: (0, 0)),
                pl.BlockSpec((gblk, GH), lambda c, i: (0, 0)),
            ],
            out_specs=pl.BlockSpec((8, 128), lambda c, i: (c, 0)),
            scratch_shapes=[
                pltpu.VMEM((1, 1), jnp.float32),   # bce partial sum
                pltpu.VMEM((1, 1), jnp.float32),   # wiou partial sum
            ],
        ),
        compiler_params=pltpu.CompilerParams(
            dimension_semantics=("parallel", "arbitrary")),
    )(pred_f, mask_f, a_gh, a_w, sind)

    # per-core partials live at rows 0, 8, ...; sum them for the final loss.
    return jnp.sum(out[::8, 0])


def _structure_loss_ref(pred, mask):
    """Pure-JAX reference mirroring the PyTorch module exactly."""
    pred = pred.astype(jnp.float32)
    mask = mask.astype(jnp.float32)
    boxsum = jax.lax.reduce_window(
        mask, 0.0, jax.lax.add,
        window_dimensions=(1, 1, _KER, _KER),
        window_strides=(1, 1, 1, 1),
        padding=((0, 0), (0, 0), (_PAD, _PAD), (_PAD, _PAD)),
    )
    avg = boxsum / float(_KER * _KER)
    weit = 1.0 + 5.0 * jnp.abs(avg - mask)
    x, z = pred, mask
    bce = jnp.maximum(x, 0.0) - x * z + jnp.log(1.0 + jnp.exp(-jnp.abs(x)))
    wbce_scalar = bce.mean()  # torch reduce='none' quirk -> reduction='mean'
    wbce = (weit * wbce_scalar).sum((2, 3)) / weit.sum((2, 3))
    p = jax.nn.sigmoid(pred)
    inter = (p * mask * weit).sum((2, 3))
    union = ((p + mask) * weit).sum((2, 3))
    wiou = 1.0 - inter / (union - inter)
    return (wbce + wiou).mean()


if __name__ == "__main__":
    key = jax.random.PRNGKey(0)

    # Case 1: the canonical small shape (no padded planes).
    k1, k2, k3, k4 = jax.random.split(key, 4)
    pred1 = jax.random.normal(k1, (2, 4, 16, 16), dtype=jnp.float32)
    mask1 = (jax.random.uniform(k2, (2, 4, 16, 16)) > 0.5).astype(jnp.float32)
    loss1 = jax.block_until_ready(structure_loss(pred1, mask1))
    ref1 = jax.block_until_ready(_structure_loss_ref(pred1, mask1))
    assert jnp.allclose(loss1, ref1, rtol=1e-4, atol=1e-5), (loss1, ref1)

    # Case 2: irregular H/W and a plane count that exercises padding/valid-mask.
    pred2 = jax.random.normal(k3, (2, 3, 20, 24), dtype=jnp.float32)
    mask2 = (jax.random.uniform(k4, (2, 3, 20, 24)) > 0.5).astype(jnp.float32)
    loss2 = jax.block_until_ready(structure_loss(pred2, mask2))
    ref2 = jax.block_until_ready(_structure_loss_ref(pred2, mask2))
    assert jnp.allclose(loss2, ref2, rtol=1e-4, atol=1e-5), (loss2, ref2)

    print("KERNEL_OK")
</pallas_src>

<mosaic_0001>
module attributes {stable_mosaic.version = 11 : i64} {
  func.func @kernel(%arg0: i32, %arg1: i32, %arg2: memref<64x16xf32, #tpu.memory_space<vmem>>, %arg3: memref<64x16xf32, #tpu.memory_space<vmem>>, %arg4: memref<64x64xbf16, #tpu.memory_space<vmem>>, %arg5: memref<16x16xbf16, #tpu.memory_space<vmem>>, %arg6: memref<4x64xf32, #tpu.memory_space<vmem>>, %arg7: memref<8x128xf32, #tpu.memory_space<vmem>>, %arg8: memref<1x1xf32, #tpu.memory_space<vmem>>, %arg9: memref<1x1xf32, #tpu.memory_space<vmem>>) attributes {dimension_semantics = [#tpu.dimension_semantics<parallel>, #tpu.dimension_semantics<arbitrary>], iteration_bounds = array<i64: 2, 1>, scalar_prefetch = 0 : i64, scratch_operands = 2 : i64, tpu.core_type = #tpu.core_type<tc>, window_params = [{transform_indices = @transform_0, window_bounds = array<i64: 64, 16>}, {transform_indices = @transform_1, window_bounds = array<i64: 64, 16>}, {pipeline_mode = #tpu.pipeline_mode<synchronous>, transform_indices = @transform_2, window_bounds = array<i64: 64, 64>}, {pipeline_mode = #tpu.pipeline_mode<synchronous>, transform_indices = @transform_3, window_bounds = array<i64: 16, 16>}, {pipeline_mode = #tpu.pipeline_mode<synchronous>, transform_indices = @transform_4, window_bounds = array<i64: 4, 64>}, {transform_indices = @transform_5, window_bounds = array<i64: 8, 128>}]} {
    %c0_i32 = arith.constant 0 : i32
    %0 = arith.cmpi eq, %arg1, %c0_i32 : i32
    %1 = arith.extui %0 : i1 to i32
    %c0_i32_0 = arith.constant 0 : i32
    %2 = arith.cmpi ne, %1, %c0_i32_0 : i32
    scf.if %2 {
      %cst_40 = arith.constant 0.000000e+00 : f32
      %94 = vector.broadcast %cst_40 : f32 to vector<1x1xf32>
      %c0_41 = arith.constant 0 : index
      %c0_42 = arith.constant 0 : index
      %95 = vector.load %arg8[%c0_41, %c0_42] : memref<1x1xf32, #tpu.memory_space<vmem>>, vector<1x1xf32>
      tpu.vector_store %arg8[%c0_41, %c0_42], %94 {strides = array<i32>} : memref<1x1xf32, #tpu.memory_space<vmem>>, vector<1x1xf32>,
      %cst_43 = arith.constant 0.000000e+00 : f32
      %96 = vector.broadcast %cst_43 : f32 to vector<1x1xf32>
      %c0_44 = arith.constant 0 : index
      %c0_45 = arith.constant 0 : index
      %97 = vector.load %arg9[%c0_44, %c0_45] : memref<1x1xf32, #tpu.memory_space<vmem>>, vector<1x1xf32>
      tpu.vector_store %arg9[%c0_44, %c0_45], %96 {strides = array<i32>} : memref<1x1xf32, #tpu.memory_space<vmem>>, vector<1x1xf32>,
    } else {
    }
    %c0 = arith.constant 0 : index
    %c0_1 = arith.constant 0 : index
    %3 = vector.load %arg2[%c0, %c0_1] : memref<64x16xf32, #tpu.memory_space<vmem>>, vector<64x16xf32>
    %c0_2 = arith.constant 0 : index
    %c0_3 = arith.constant 0 : index
    %4 = vector.load %arg3[%c0_2, %c0_3] : memref<64x16xf32, #tpu.memory_space<vmem>>, vector<64x16xf32>
    %5 = arith.truncf %4 : vector<64x16xf32> to vector<64x16xbf16>
    %c0_4 = arith.constant 0 : index
    %c0_5 = arith.constant 0 : index
    %6 = vector.load %arg5[%c0_4, %c0_5] : memref<16x16xbf16, #tpu.memory_space<vmem>>, vector<16x16xbf16>
    %cst = arith.constant dense<0.000000e+00> : vector<64x16xf32>
    %7 = tpu.matmul %5, %6, %cst {dimension_numbers = #tpu.dot_dimension_numbers<[1], [0], [0], [1], [0, 0, 1, 1], [], []>} : vector<64x16xbf16>, vector<16x16xbf16>, vector<64x16xf32> -> vector<64x16xf32>
    %c0_6 = arith.constant 0 : index
    %c0_7 = arith.constant 0 : index
    %8 = vector.load %arg4[%c0_6, %c0_7] : memref<64x64xbf16, #tpu.memory_space<vmem>>, vector<64x64xbf16>
    %9 = arith.truncf %7 : vector<64x16xf32> to vector<64x16xbf16>
    %cst_8 = arith.constant dense<0.000000e+00> : vector<64x16xf32>
    %10 = tpu.matmul %8, %9, %cst_8 {dimension_numbers = #tpu.dot_dimension_numbers<[1], [0], [0], [1], [0, 0, 1, 1], [], []>} : vector<64x64xbf16>, vector<64x16xbf16>, vector<64x16xf32> -> vector<64x16xf32>
    %cst_9 = arith.constant 0.00104058278 : f32
    %11 = vector.broadcast %cst_9 : f32 to vector<64x16xf32>
    %12 = arith.mulf %10, %11 : vector<64x16xf32>
    %13 = arith.subf %12, %4 : vector<64x16xf32>
    %14 = math.absf %13 : vector<64x16xf32>
    %cst_10 = arith.constant 5.000000e+00 : f32
    %15 = vector.broadcast %cst_10 : f32 to vector<64x16xf32>
    %16 = arith.mulf %15, %14 : vector<64x16xf32>
    %cst_11 = arith.constant 1.000000e+00 : f32
    %17 = vector.broadcast %cst_11 : f32 to vector<64x16xf32>
    %18 = arith.addf %17, %16 : vector<64x16xf32>
    %19 = math.absf %3 : vector<64x16xf32>
    %cst_12 = arith.constant 0.000000e+00 : f32
    %20 = vector.broadcast %cst_12 : f32 to vector<64x16xf32>
    %21 = arith.subf %20, %19 : vector<64x16xf32>
    %22 = math.exp %21 : vector<64x16xf32>
    %cst_13 = arith.constant 0.000000e+00 : f32
    %23 = vector.broadcast %cst_13 : f32 to vector<64x16xf32>
    %24 = arith.maximumf %3, %23 : vector<64x16xf32>
    %25 = arith.mulf %3, %4 : vector<64x16xf32>
    %26 = arith.subf %24, %25 : vector<64x16xf32>
    %cst_14 = arith.constant 1.000000e+00 : f32
    %27 = vector.broadcast %cst_14 : f32 to vector<64x16xf32>
    %28 = arith.addf %27, %22 : vector<64x16xf32>
    %29 = math.log %28 : vector<64x16xf32>
    %30 = arith.addf %26, %29 : vector<64x16xf32>
    %cst_15 = arith.constant 1.000000e+00 : f32
    %31 = vector.broadcast %cst_15 : f32 to vector<64x16xf32>
    %32 = arith.addf %31, %22 : vector<64x16xf32>
    %cst_16 = arith.constant 1.000000e+00 : f32
    %33 = vector.broadcast %cst_16 : f32 to vector<64x16xf32>
    %34 = arith.divf %33, %32 : vector<64x16xf32>
    %cst_17 = arith.constant 0.000000e+00 : f32
    %35 = vector.broadcast %cst_17 : f32 to vector<64x16xf32>
    %36 = arith.cmpf oge, %3, %35 : vector<64x16xf32>
    %37 = arith.mulf %22, %34 : vector<64x16xf32>
    %38 = arith.select %36, %34, %37 : vector<64x16xi1>, vector<64x16xf32>
    %c1_i32 = arith.constant 1 : i32
    %39 = arith.muli %arg0, %c1_i32 : i32
    %40 = arith.addi %39, %arg1 : i32
    %c4_i32 = arith.constant 4 : i32
    %41 = arith.muli %40, %c4_i32 : i32
    %42 = tpu.iota {dimensions = array<i32: 0>} : vector<64x1xi32>
    %c16_i32 = arith.constant 16 : i32
    %43 = arith.muli %41, %c16_i32 : i32
    %44 = vector.broadcast %43 : i32 to vector<64x1xi32>
    %45 = arith.addi %44, %42 : vector<64x1xi32>
    %c128_i32 = arith.constant 128 : i32
    %46 = vector.broadcast %c128_i32 : i32 to vector<64x1xi32>
    %47 = arith.cmpi slt, %45, %46 : vector<64x1xi32>
    %48 = arith.extui %47 : vector<64x1xi1> to vector<64x1xi32>
    %49 = arith.sitofp %48 : vector<64x1xi32> to vector<64x1xf32>
    %50 = tpu.iota {dimensions = array<i32: 0>} : vector<4x1xi32>
    %51 = vector.broadcast %41 : i32 to vector<4x1xi32>
    %52 = arith.addi %51, %50 : vector<4x1xi32>
    %c8_i32 = arith.constant 8 : i32
    %53 = vector.broadcast %c8_i32 : i32 to vector<4x1xi32>
    %54 = arith.cmpi slt, %52, %53 : vector<4x1xi32>
    %c0_18 = arith.constant 0 : index
    %c0_19 = arith.constant 0 : index
    %55 = vector.load %arg8[%c0_18, %c0_19] : memref<1x1xf32, #tpu.memory_space<vmem>>, vector<1x1xf32>
    %56 = vector.broadcast %49 : vector<64x1xf32> to vector<64x16xf32>
    %57 = arith.mulf %30, %56 : vector<64x16xf32>
    %58 = vector.shape_cast %57 : vector<64x16xf32> to vector<1x64x16xf32>
    %cst_20 = arith.constant dense<0.000000e+00> : vector<1xf32>
    %59 = vector.multi_reduction <add>, %58, %cst_20 [1, 2] : vector<1x64x16xf32> to vector<1xf32>
    %60 = vector.shape_cast %59 : vector<1xf32> to vector<1x1x1xf32>
    %61 = vector.extract %60[0, 0, 0] : f32 from vector<1x1x1xf32>
    %62 = vector.broadcast %61 : f32 to vector<1x1xf32>
    %63 = arith.addf %55, %62 : vector<1x1xf32>
    %c0_21 = arith.constant 0 : index
    %c0_22 = arith.constant 0 : index
    %64 = vector.load %arg8[%c0_21, %c0_22] : memref<1x1xf32, #tpu.memory_space<vmem>>, vector<1x1xf32>
    tpu.vector_store %arg8[%c0_21, %c0_22], %63 {strides = array<i32>} : memref<1x1xf32, #tpu.memory_space<vmem>>, vector<1x1xf32>,
    %c0_23 = arith.constant 0 : index
    %c0_24 = arith.constant 0 : index
    %65 = vector.load %arg6[%c0_23, %c0_24] : memref<4x64xf32, #tpu.memory_space<vmem>>, vector<4x64xf32>
    %66 = arith.mulf %38, %4 : vector<64x16xf32>
    %67 = arith.mulf %66, %18 : vector<64x16xf32>
    %cst_25 = arith.constant dense<0.000000e+00> : vector<4x16xf32>
    %68 = tpu.matmul %65, %67, %cst_25 {dimension_numbers = #tpu.dot_dimension_numbers<[1], [0], [0], [1], [0, 0, 1, 1], [], []>} : vector<4x64xf32>, vector<64x16xf32>, vector<4x16xf32> -> vector<4x16xf32>
    %cst_26 = arith.constant dense<0.000000e+00> : vector<4xf32>
    %69 = vector.multi_reduction <add>, %68, %cst_26 [1] : vector<4x16xf32> to vector<4xf32>
    %70 = vector.shape_cast %69 : vector<4xf32> to vector<4x1xf32>
    %c0_27 = arith.constant 0 : index
    %c0_28 = arith.constant 0 : index
    %71 = vector.load %arg6[%c0_27, %c0_28] : memref<4x64xf32, #tpu.memory_space<vmem>>, vector<4x64xf32>
    %72 = arith.addf %38, %4 : vector<64x16xf32>
    %73 = arith.mulf %72, %18 : vector<64x16xf32>
    %cst_29 = arith.constant dense<0.000000e+00> : vector<4x16xf32>
    %74 = tpu.matmul %71, %73, %cst_29 {dimension_numbers = #tpu.dot_dimension_numbers<[1], [0], [0], [1], [0, 0, 1, 1], [], []>} : vector<4x64xf32>, vector<64x16xf32>, vector<4x16xf32> -> vector<4x16xf32>
    %cst_30 = arith.constant dense<0.000000e+00> : vector<4xf32>
    %75 = vector.multi_reduction <add>, %74, %cst_30 [1] : vector<4x16xf32> to vector<4xf32>
    %76 = vector.shape_cast %75 : vector<4xf32> to vector<4x1xf32>
    %77 = arith.subf %76, %70 : vector<4x1xf32>
    %78 = arith.divf %70, %77 : vector<4x1xf32>
    %cst_31 = arith.constant 1.000000e+00 : f32
    %79 = vector.broadcast %cst_31 : f32 to vector<4x1xf32>
    %80 = arith.subf %79, %78 : vector<4x1xf32>
    %c0_32 = arith.constant 0 : index
    %c0_33 = arith.constant 0 : index
    %81 = vector.load %arg9[%c0_32, %c0_33] : memref<1x1xf32, #tpu.memory_space<vmem>>, vector<1x1xf32>
    %cst_34 = arith.constant 0.000000e+00 : f32
    %82 = vector.broadcast %cst_34 : f32 to vector<4x1xf32>
    %83 = arith.select %54, %80, %82 : vector<4x1xi1>, vector<4x1xf32>
    %84 = vector.shape_cast %83 : vector<4x1xf32> to vector<1x4x1xf32>
    %cst_35 = arith.constant dense<0.000000e+00> : vector<1xf32>
    %85 = vector.multi_reduction <add>, %84, %cst_35 [1, 2] : vector<1x4x1xf32> to vector<1xf32>
    %86 = vector.shape_cast %85 : vector<1xf32> to vector<1x1x1xf32>
    %87 = vector.extract %86[0, 0, 0] : f32 from vector<1x1x1xf32>
    %88 = vector.broadcast %87 : f32 to vector<1x1xf32>
    %89 = arith.addf %81, %88 : vector<1x1xf32>
    %c0_36 = arith.constant 0 : index
    %c0_37 = arith.constant 0 : index
    %90 = vector.load %arg9[%c0_36, %c0_37] : memref<1x1xf32, #tpu.memory_space<vmem>>, vector<1x1xf32>
    tpu.vector_store %arg9[%c0_36, %c0_37], %89 {strides = array<i32>} : memref<1x1xf32, #tpu.memory_space<vmem>>, vector<1x1xf32>,
    %c0_i32_38 = arith.constant 0 : i32
    %91 = arith.cmpi eq, %arg1, %c0_i32_38 : i32
    %92 = arith.extui %91 : i1 to i32
    %c0_i32_39 = arith.constant 0 : i32
    %93 = arith.cmpi ne, %92, %c0_i32_39 : i32
    scf.if %93 {
      %c0_40 = arith.constant 0 : index
      %c0_41 = arith.constant 0 : index
      %94 = vector.load %arg8[%c0_40, %c0_41] : memref<1x1xf32, #tpu.memory_space<vmem>>, vector<1x1xf32>
      %cst_42 = arith.constant 4.8828125E-4 : f32
      %95 = vector.broadcast %cst_42 : f32 to vector<1x1xf32>
      %96 = arith.mulf %94, %95 : vector<1x1xf32>
      %c0_43 = arith.constant 0 : index
      %c0_44 = arith.constant 0 : index
      %97 = vector.load %arg9[%c0_43, %c0_44] : memref<1x1xf32, #tpu.memory_space<vmem>>, vector<1x1xf32>
      %cst_45 = arith.constant 1.250000e-01 : f32
      %98 = vector.broadcast %cst_45 : f32 to vector<1x1xf32>
      %99 = arith.mulf %97, %98 : vector<1x1xf32>
      %100 = arith.addf %96, %99 : vector<1x1xf32>
      %101 = vector.shape_cast %100 : vector<1x1xf32> to vector<1x1xf32>
      %102 = vector.broadcast %101 : vector<1x1xf32> to vector<8x128xf32>
      %c0_46 = arith.constant 0 : index
      %c0_47 = arith.constant 0 : index
      %103 = vector.load %arg7[%c0_46, %c0_47] : memref<8x128xf32, #tpu.memory_space<vmem>>, vector<8x128xf32>
      tpu.vector_store %arg7[%c0_46, %c0_47], %102 {strides = array<i32>} : memref<8x128xf32, #tpu.memory_space<vmem>>, vector<8x128xf32>,
    } else {
    }
    return
  }
  func.func @transform_0(%arg0: i32, %arg1: i32) -> (i32, i32) {
    %c1_i32 = arith.constant 1 : i32
    %0 = arith.muli %arg0, %c1_i32 : i32
    %1 = arith.addi %0, %arg1 : i32
    %c0_i32 = arith.constant 0 : i32
    %c0_i32_0 = arith.constant 0 : i32
    return %1, %c0_i32 : i32, i32
  }
  func.func @transform_1(%arg0: i32, %arg1: i32) -> (i32, i32) {
    %c1_i32 = arith.constant 1 : i32
    %0 = arith.muli %arg0, %c1_i32 : i32
    %1 = arith.addi %0, %arg1 : i32
    %c0_i32 = arith.constant 0 : i32
    %c0_i32_0 = arith.constant 0 : i32
    return %1, %c0_i32 : i32, i32
  }
  func.func @transform_2(%arg0: i32, %arg1: i32) -> (i32, i32) {
    %c0_i32 = arith.constant 0 : i32
    %c0_i32_0 = arith.constant 0 : i32
    %c0_i32_1 = arith.constant 0 : i32
    return %c0_i32, %c0_i32_0 : i32, i32
  }
  func.func @transform_3(%arg0: i32, %arg1: i32) -> (i32, i32) {
    %c0_i32 = arith.constant 0 : i32
    %c0_i32_0 = arith.constant 0 : i32
    %c0_i32_1 = arith.constant 0 : i32
    return %c0_i32, %c0_i32_0 : i32, i32
  }
  func.func @transform_4(%arg0: i32, %arg1: i32) -> (i32, i32) {
    %c0_i32 = arith.constant 0 : i32
    %c0_i32_0 = arith.constant 0 : i32
    %c0_i32_1 = arith.constant 0 : i32
    return %c0_i32, %c0_i32_0 : i32, i32
  }
  func.func @transform_5(%arg0: i32, %arg1: i32) -> (i32, i32) {
    %c0_i32 = arith.constant 0 : i32
    %c0_i32_0 = arith.constant 0 : i32
    return %arg0, %c0_i32 : i32, i32
  }
}

</mosaic_0001>

<llo_original>
// kernel: tpu_custom_call.1
$region0: #{tpu_custom_call.1}
  #allocation0 [shape = 'u32[]', space=smem, size = 0x4, offset = 0x4, fixed_abs, tag = 'smem constant byte address 0x4 - core index']
  #allocation1 [shape = 'u32[72,128]{1,0:T(1,128)}', space=vmem, size = 0x9000, scoped, tag = 'internal scratch']
  #allocation2 [shape = 'f32[1,1]{1,0:T(1,128)}', space=vmem, size = 0x200, scoped, tag = 'scratch operand']
  #allocation3 [shape = 'f32[1,1]{1,0:T(1,128)}', space=vmem, size = 0x200, scoped, tag = 'scratch operand']
  %s0 = inlined_call_operand.vmem [shape: f32[128,16], index: 0, kind: input, shape index: {}]
  %s1 = inlined_call_operand.vmem [shape: f32[128,16], index: 1, kind: input, shape index: {}]
  %s2 = inlined_call_operand.vmem [shape: bf16[64,64], index: 2, kind: input, shape index: {}]
  %s3 = inlined_call_operand.vmem [shape: bf16[16,16], index: 3, kind: input, shape index: {}]
  %s4 = inlined_call_operand.vmem [shape: f32[4,64], index: 4, kind: input, shape index: {}]
  %s5 = inlined_call_operand.hbm [shape: f32[16,128], index: 5, kind: output, shape index: {}]
  %s6 = sld [smem:[#allocation0]]
  $region61: #{tpu_custom_call.1} parent=0
    _
  %s8 = ssub.s32 1, %s6
  %s9 = scalar_select 0, %s8, %s6
  $region1: #{tpu_custom_call.1} parent=0
    #allocation4 [shape = 'u8[8192]{0}', space=vmem, size = 0x2000, scoped, tag = 'output window, operand 0']
    #allocation5 [shape = 's32[2]{0}', space=sflag, size = 0x8, scoped, tag = 'scoped memory for tpu_custom_call.1']
    %10 = vsyncpa [#allocation5], 0
    %s11 = scalar_lea.sflag [#allocation5], 1
    %12 = vsyncpa %s11, 0
    loop: start=0, step=1, limit=4
    $region2: #{tpu_custom_call.1} parent=1 // loop_pre_header
      _
    $region3: #{tpu_custom_call.1} parent=1 // loop_header
      %s14 = sphi 0, %s18
      %p15 = scmp.ge.s32.totalorder %s14, 4
      %s21 = sphi 0, %s33
      %s22 = sphi 0, %s29
      %s23 = sphi 0, %s21
      %s24 = sphi 0, %s22
      %s25 = sphi 0, %s23
      %s26 = sphi 0, %s24
      %s38 = sphi 0, %s40
      %s41 = sphi 0, %s38
      %s42 = sphi 0, %s41
      %s58 = sphi 0, %s42
      %s66 = sphi 0, %s68
      %s69 = sphi 0, %s66
      %s70 = sphi 0, %s69
      %s86 = sphi 0, %s70
      %s90 = sphi 0, %s90
      %s92 = sphi 0, %s90
      %s93 = sphi 0, %s92
      %s107 = sphi 0, %s93
      %s111 = sphi 0, %s111
      %s113 = sphi 0, %s111
      %s114 = sphi 0, %s113
      %s128 = sphi 0, %s114
      %s132 = sphi 0, %s132
      %s134 = sphi 0, %s132
      %s135 = sphi 0, %s134
      %s149 = sphi 0, %s135
      %s155 = sphi 0, %s157
      %s158 = sphi 0, %s155
      %s159 = sphi 0, %s158
      %s175 = sphi 0, %s159
    $region4: #{tpu_custom_call.1} parent=1 // loop_header_branch
      %17 = sbr.rel (%p15) target = $region8
    $region5: #{tpu_custom_call.1} parent=1 // loop_body
      %s19 = ssub.s32 %s14, 1
      %s20 = ssub.s32 %s14, 2
      %s27 = sadd.s32 1, %s22
      %p28 = scmp.ge.s32.totalorder %s27, 1
      %s29 = scalar_select %p28, 0, %s27
      %s30 = sadd.s32 1, %s21
      %s31 = scalar_select %p28, %s30, %s21
      %p32 = scmp.ge.s32.totalorder %s31, 2
      %s33 = scalar_select %p32, 0, %s31
      %s34 = sadd.s32 %s21, %s22
      %s35 = sadd.s32 %s33, %s29
      %s36 = ssub.s32 %s34, %s35
      %p37 = scmp.eq.s32.totalorder %s36, 0
      %s39 = sadd.s32 %s38, 1
      %s40 = scalar_select %p37, %s38, %s39
      %p43 = pneg %p37
      %p44 = scmp.eq.s32.totalorder %s14, 1
      %p45 = por %p43, %p44
      %p46 = scmp.ne.s32.totalorder %s38, %s41
      %p47 = scmp.eq.s32.totalorder %s14, 0
      %p48 = por %p46, %p47
      %p49 = scmp.ne.s32.totalorder %s38, %s41
      %p50 = scmp.eq.s32.totalorder %s19, 1
      %p51 = por %p49, %p50
      %p52 = scmp.ne.s32.totalorder %s41, %s42
      %p53 = scmp.eq.s32.totalorder %s19, 0
      %p54 = por %p52, %p53
      %p55 = scmp.ne.s32.totalorder %s41, %s42
      %p56 = scmp.eq.s32.totalorder %s20, 1
      %p57 = por %p55, %p56
      %p59 = scmp.ne.s32.totalorder %s42, %s58
      %p60 = scmp.eq.s32.totalorder %s20, 0
      %p61 = por %p59, %p60
      %s62 = sadd.s32 %s21, %s22
      %s63 = sadd.s32 %s33, %s29
      %s64 = ssub.s32 %s62, %s63
      %p65 = scmp.eq.s32.totalorder %s64, 0
      %s67 = sadd.s32 %s66, 1
      %s68 = scalar_select %p65, %s66, %s67
      %p71 = pneg %p65
      %p72 = scmp.eq.s32.totalorder %s14, 1
      %p73 = por %p71, %p72
      %p74 = scmp.ne.s32.totalorder %s66, %s69
      %p75 = scmp.eq.s32.totalorder %s14, 0
      %p76 = por %p74, %p75
      %p77 = scmp.ne.s32.totalorder %s66, %s69
      %p78 = scmp.eq.s32.totalorder %s19, 1
      %p79 = por %p77, %p78
      %p80 = scmp.ne.s32.totalorder %s69, %s70
      %p81 = scmp.eq.s32.totalorder %s19, 0
      %p82 = por %p80, %p81
      %p83 = scmp.ne.s32.totalorder %s69, %s70
      %p84 = scmp.eq.s32.totalorder %s20, 1
      %p85 = por %p83, %p84
      %p87 = scmp.ne.s32.totalorder %s70, %s86
      %p88 = scmp.eq.s32.totalorder %s20, 0
      %p89 = por %p87, %p88
      %s91 = sadd.s32 %s90, 1
      %p94 = scmp.eq.s32.totalorder %s14, 1
      %p95 = scmp.ne.s32.totalorder %s90, %s92
      %p96 = scmp.eq.s32.totalorder %s14, 0
      %p97 = por %p95, %p96
      %p98 = scmp.ne.s32.totalorder %s90, %s92
      %p99 = scmp.eq.s32.totalorder %s19, 1
      %p100 = por %p98, %p99
      %p101 = scmp.ne.s32.totalorder %s92, %s93
      %p102 = scmp.eq.s32.totalorder %s19, 0
      %p103 = por %p101, %p102
      %p104 = scmp.ne.s32.totalorder %s92, %s93
      %p105 = scmp.eq.s32.totalorder %s20, 1
      %p106 = por %p104, %p105
      %p108 = scmp.ne.s32.totalorder %s93, %s107
      %p109 = scmp.eq.s32.totalorder %s20, 0
      %p110 = por %p108, %p109
      %s112 = sadd.s32 %s111, 1
      %p115 = scmp.eq.s32.totalorder %s14, 1
      %p116 = scmp.ne.s32.totalorder %s111, %s113
      %p117 = scmp.eq.s32.totalorder %s14, 0
      %p118 = por %p116, %p117
      %p119 = scmp.ne.s32.totalorder %s111, %s113
      %p120 = scmp.eq.s32.totalorder %s19, 1
      %p121 = por %p119, %p120
      %p122 = scmp.ne.s32.totalorder %s113, %s114
      %p123 = scmp.eq.s32.totalorder %s19, 0
      %p124 = por %p122, %p123
      %p125 = scmp.ne.s32.totalorder %s113, %s114
      %p126 = scmp.eq.s32.totalorder %s20, 1
      %p127 = por %p125, %p126
      %p129 = scmp.ne.s32.totalorder %s114, %s128
      %p130 = scmp.eq.s32.totalorder %s20, 0
      %p131 = por %p129, %p130
      %s133 = sadd.s32 %s132, 1
      %p136 = scmp.eq.s32.totalorder %s14, 1
      %p137 = scmp.ne.s32.totalorder %s132, %s134
      %p138 = scmp.eq.s32.totalorder %s14, 0
      %p139 = por %p137, %p138
      %p140 = scmp.ne.s32.totalorder %s132, %s134
      %p141 = scmp.eq.s32.totalorder %s19, 1
      %p142 = por %p140, %p141
      %p143 = scmp.ne.s32.totalorder %s134, %s135
      %p144 = scmp.eq.s32.totalorder %s19, 0
      %p145 = por %p143, %p144
      %p146 = scmp.ne.s32.totalorder %s134, %s135
      %p147 = scmp.eq.s32.totalorder %s20, 1
      %p148 = por %p146, %p147
      %p150 = scmp.ne.s32.totalorder %s135, %s149
      %p151 = scmp.eq.s32.totalorder %s20, 0
      %p152 = por %p150, %p151
      %s153 = ssub.s32 %s21, %s33
      %p154 = scmp.eq.s32.totalorder %s153, 0
      %s156 = sadd.s32 %s155, 1
      %s157 = scalar_select %p154, %s155, %s156
      %p160 = pneg %p154
      %p161 = scmp.eq.s32.totalorder %s14, 1
      %p162 = por %p160, %p161
      %p163 = scmp.ne.s32.totalorder %s155, %s158
      %p164 = scmp.eq.s32.totalorder %s14, 0
      %p165 = por %p163, %p164
      %p166 = scmp.ne.s32.totalorder %s155, %s158
      %p167 = scmp.eq.s32.totalorder %s19, 1
      %p168 = por %p166, %p167
      %p169 = scmp.ne.s32.totalorder %s158, %s159
      %p170 = scmp.eq.s32.totalorder %s19, 0
      %p171 = por %p169, %p170
      %p172 = scmp.ne.s32.totalorder %s158, %s159
      %p173 = scmp.eq.s32.totalorder %s20, 1
      %p174 = por %p172, %p173
      %p176 = scmp.ne.s32.totalorder %s159, %s175
      %p177 = scmp.eq.s32.totalorder %s20, 0
      %p178 = por %p176, %p177
      %p179 = scmp.le.s32.totalorder 1, %s14
      %p180 = scmp.lt.s32.totalorder %s14, 3
      %p181 = pnand %p179, %p180
      %p182 = pneg %p181
      // Predicated region
      $region9: #{tpu_custom_call.1} parent=5 // pred_check
        _
      $region10: #{tpu_custom_call.1} parent=5 // pred_check_branch
        %184 = sbr.rel (%p181) target = $region12
      $region11: #{tpu_custom_call.1} parent=5 // pred_region
        %s185 = ssub.s32 %s14, 1
        // Predicated region
        $region13: #{tpu_custom_call.1} parent=11 // pred_check
          %p186 = pneg %p103
        $region14: #{tpu_custom_call.1} parent=11 // pred_check_branch
          %188 = sbr.rel (%p186) target = $region16
        $region15: #{tpu_custom_call.1} parent=11 // pred_region
          _
        $region16: #{tpu_custom_call.1} parent=11 // pred_fallthru
          _
        // Predicated region
        $region17: #{tpu_custom_call.1} parent=11 // pred_check
          %p189 = pneg %p124
        $region18: #{tpu_custom_call.1} parent=11 // pred_check_branch
          %191 = sbr.rel (%p189) target = $region20
        $region19: #{tpu_custom_call.1} parent=11 // pred_region
          _
        $region20: #{tpu_custom_call.1} parent=11 // pred_fallthru
          _
        // Predicated region
        $region21: #{tpu_custom_call.1} parent=11 // pred_check
          %p192 = pneg %p145
        $region22: #{tpu_custom_call.1} parent=11 // pred_check_branch
          %194 = sbr.rel (%p192) target = $region24
        $region23: #{tpu_custom_call.1} parent=11 // pred_region
          _
        $region24: #{tpu_custom_call.1} parent=11 // pred_fallthru
          _
      $region12: #{tpu_custom_call.1} parent=5 // pred_fallthru
        _
      %p195 = scmp.lt.s32.totalorder %s14, 2
      // Predicated region
      $region25: #{tpu_custom_call.1} parent=5 // pred_check
        %p196 = pneg %p195
      $region26: #{tpu_custom_call.1} parent=5 // pred_check_branch
        %198 = sbr.rel (%p196) target = $region28
      $region27: #{tpu_custom_call.1} parent=5 // pred_region
        // Predicated region
        $region29: #{tpu_custom_call.1} parent=27 // pred_check
          %p199 = pneg %p48
        $region30: #{tpu_custom_call.1} parent=27 // pred_check_branch
          %201 = sbr.rel (%p199) target = $region32
        $region31: #{tpu_custom_call.1} parent=27 // pred_region
          %s202 = sadd.s32 %s21, %s22
          %s203 = smul.u32 8, %s202
          %p204 = scmp.lt.s32.totalorder %s203, 15
          %s205 = scalar_select %p204, %s203, 15
          %s206 = smul.addr %s205, 8
          %s207 = scalar_lea.vmem %s0, %s206
          %s208 = sadd.s32 %s21, %s22
          %s209 = smul.u32 8, %s208
        $region32: #{tpu_custom_call.1} parent=27 // pred_fallthru
          _
        // Predicated region
        $region33: #{tpu_custom_call.1} parent=27 // pred_check
          %p210 = pneg %p76
        $region34: #{tpu_custom_call.1} parent=27 // pred_check_branch
          %212 = sbr.rel (%p210) target = $region36
        $region35: #{tpu_custom_call.1} parent=27 // pred_region
          %s213 = sadd.s32 %s21, %s22
          %s214 = smul.u32 8, %s213
          %p215 = scmp.lt.s32.totalorder %s214, 15
          %s216 = scalar_select %p215, %s214, 15
          %s217 = smul.addr %s216, 8
          %s218 = scalar_lea.vmem %s1, %s217
          %s219 = sadd.s32 %s21, %s22
          %s220 = smul.u32 8, %s219
        $region36: #{tpu_custom_call.1} parent=27 // pred_fallthru
          _
      $region28: #{tpu_custom_call.1} parent=5 // pred_fallthru
        _
      %p221 = scmp.le.s32.totalorder 1, %s14
      %p222 = scmp.lt.s32.totalorder %s14, 3
      %p223 = pnand %p221, %p222
      %p224 = pneg %p223
      // Predicated region
      $region37: #{tpu_custom_call.1} parent=5 // pred_check
        _
      $region38: #{tpu_custom_call.1} parent=5 // pred_check_branch
        %226 = sbr.rel (%p223) target = $region40
      $region39: #{tpu_custom_call.1} parent=5 // pred_region
        %s227 = ssub.s32 %s14, 1
        %s228 = sadd.s32 %s23, %s24
        %s229 = smul.u32 8, %s228
        %p230 = scmp.lt.s32.totalorder %s229, 15
        %s231 = scalar_select %p230, %s229, 15
        %s232 = smul.addr %s231, 8
        %s233 = scalar_lea.vmem %s0, %s232
        %p234 = pneg %p54
        %p235 = pneg %p51
        %s236 = sadd.s32 %s23, %s24
        %s237 = smul.u32 8, %s236
        %p238 = scmp.lt.s32.totalorder %s237, 15
        %s239 = scalar_select %p238, %s237, 15
        %s240 = smul.addr %s239, 8
        %s241 = scalar_lea.vmem %s1, %s240
        %p242 = pneg %p82
        %p243 = pneg %p79
        %p244 = pneg %p103
        %p245 = pneg %p100
        %p246 = pneg %p124
        %p247 = pneg %p121
        %p248 = pneg %p145
        %p249 = pneg %p142
        %p250 = pneg %p171
        %p251 = pneg %p168
        %s252 = sand.u32 %s158, 1
        %s253 = scalar_lea.sflag [#allocation5], %s252
        %s254 = sand.u32 %s158, 1
        %s255 = smul.addr %s254, 8
        %s256 = scalar_lea.vmem [#allocation4], %s255
        %s257 = sadd.s32 %s23, %s24
        %s258 = smul.u32 8, %s257
        %p259 = scmp.lt.s32.totalorder %s258, 15
        %s260 = scalar_select %p259, %s258, 15
        %s261 = smul.addr %s260, 8
        %s262 = scalar_lea.vmem %s0, %s261
        %s263 = sadd.s32 %s23, %s24
        %s264 = smul.u32 8, %s263
        %s265 = sadd.s32 %s23, %s24
        %s266 = smul.u32 8, %s265
        %p267 = scmp.lt.s32.totalorder %s266, 15
        %s268 = scalar_select %p267, %s266, 15
        %s269 = smul.addr %s268, 8
        %s270 = scalar_lea.vmem %s1, %s269
        %s271 = sadd.s32 %s23, %s24
        %s272 = smul.u32 8, %s271
        %p274 = scmp.eq.s32.totalorder %s24, 0
        // Predicated region
        $region41: #{tpu_custom_call.1} parent=39 // pred_check
          %p275 = pneg %p274
        $region42: #{tpu_custom_call.1} parent=39 // pred_check_branch
          %277 = sbr.rel (%p275) target = $region44
        $region43: #{tpu_custom_call.1} parent=39 // pred_region
          %vm278 = vcmask 0
          %279 = vst.msk [vmem:[#allocation2] sm:$0x1] %vm278, 0.0
          %280 = vst.msk [vmem:[#allocation3] sm:$0x1] %vm278, 0.0
        $region44: #{tpu_custom_call.1} parent=39 // pred_fallthru
          _
        %v281 = vld [vmem:[%s262] sm:$0xff]
        %v282 = vld [vmem:[%s262 + $0x8] sm:$0xff]
        %v283 = vld [vmem:[%s262 + $0x10] sm:$0xff]
        %v284 = vld [vmem:[%s262 + $0x18] sm:$0xff]
        %v285 = vld [vmem:[%s262 + $0x20] sm:$0xff]
        %v286 = vld [vmem:[%s262 + $0x28] sm:$0xff]
        %v287 = vld [vmem:[%s262 + $0x30] sm:$0xff]
        %v288 = vld [vmem:[%s262 + $0x38] sm:$0xff]
        %v289 = vld [vmem:[%s270] sm:$0xff]
        %v290 = vld [vmem:[%s270 + $0x8] sm:$0xff]
        %v291 = vld [vmem:[%s270 + $0x10] sm:$0xff]
        %v292 = vld [vmem:[%s270 + $0x18] sm:$0xff]
        %v293 = vld [vmem:[%s270 + $0x20] sm:$0xff]
        %v294 = vld [vmem:[%s270 + $0x28] sm:$0xff]
        %v295 = vld [vmem:[%s270 + $0x30] sm:$0xff]
        %v296 = vld [vmem:[%s270 + $0x38] sm:$0xff]
        %v297 = vpack.c.bf16 %v290, %v289
        %v298 = vpack.c.bf16 %v292, %v291
        %v299 = vpack.c.bf16 %v294, %v293
        %v300 = vpack.c.bf16 %v296, %v295
        %v301 = vld [vmem:[%s3] sm:$0xf]
        %v302 = vld [vmem:[%s3 + $0x4] sm:$0xf]
        %v305 = vunpack.c.l.b16 %v301
        %v306 = vunpack.c.l.b16 %v302
        %v307 = vpack.c.b16 %v306, %v305
        %vm309 = vcmask 130048
        %v311 = vsel %vm309, %v297, 0
        %v314 = vsel %vm309, %v298, 0
        %v317 = vsel %vm309, %v299, 0
        %v320 = vsel %vm309, %v300, 0
        %322 = vmatpush.bf16.msra.mxu0 0
        %323 = vmatpush.bf16.msra.mxu0 0
        %324 = vmatpush.bf16.msra.mxu0 0
        %325 = vmatpush.bf16.msra.mxu0 0
        %326 = vmatpush.bf16.msra.mxu0 0
        %327 = vmatpush.bf16.msra.mxu0 0
        %328 = vmatpush.bf16.msra.mxu0 0
        %329 = vmatpush.bf16.msra.mxu0 %v307
        %330 = vmatmul.bf16.gmra.mxu0 %v311
        %v331 = vpop.f32.mrf.mxu0
        %v332 = vadd.f32 0.0, %v331
        %v333 = vpop.f32.mrf.mxu0
        %v334 = vadd.f32 0.0, %v333
        %335 = vmatmul.bf16.gmra.mxu0 %v314
        %v336 = vpop.f32.mrf.mxu0
        %v337 = vadd.f32 0.0, %v336
        %v338 = vpop.f32.mrf.mxu0
        %v339 = vadd.f32 0.0, %v338
        %340 = vmatmul.bf16.gmra.mxu0 %v317
        %v341 = vpop.f32.mrf.mxu0
        %v342 = vadd.f32 0.0, %v341
        %v343 = vpop.f32.mrf.mxu0
        %v344 = vadd.f32 0.0, %v343
        %345 = vmatmul.bf16.gmra.mxu0 %v320
        %v346 = vpop.f32.mrf.mxu0
        %v347 = vadd.f32 0.0, %v346
        %v348 = vpop.f32.mrf.mxu0
        %v349 = vadd.f32 0.0, %v348
        %350 = vdwg.mxu0
        %v351 = vld [vmem:[%s2] sm:$0xf]
        %v352 = vld [vmem:[%s2 + $0x4] sm:$0xf]
        %v353 = vld [vmem:[%s2 + $0x8] sm:$0xf]
        %v354 = vld [vmem:[%s2 + $0xc] sm:$0xf]
        %v355 = vld [vmem:[%s2 + $0x10] sm:$0xf]
        %v356 = vld [vmem:[%s2 + $0x14] sm:$0xf]
        %v357 = vld [vmem:[%s2 + $0x18] sm:$0xf]
        %v358 = vld [vmem:[%s2 + $0x1c] sm:$0xf]
        %v359 = vpack.c.bf16 %v334, %v332
        %v360 = vpack.c.bf16 %v339, %v337
        %v361 = vpack.c.bf16 %v344, %v342
        %v362 = vpack.c.bf16 %v349, %v347
        %v371 = vunpack.c.l.b16 %v351
        %v372 = vunpack.c.l.b16 %v352
        %v373 = vunpack.c.l.b16 %v353
        %v374 = vunpack.c.l.b16 %v354
        %v375 = vunpack.c.l.b16 %v355
        %v376 = vunpack.c.l.b16 %v356
        %v377 = vunpack.c.l.b16 %v357
        %v378 = vunpack.c.l.b16 %v358
        %v379 = vpack.c.b16 %v372, %v371
        %v380 = vpack.c.b16 %v374, %v373
        %v381 = vpack.c.b16 %v376, %v375
        %v382 = vpack.c.b16 %v378, %v377
        %vm383 = vcmask 523264
        %v385 = vsel %vm383, %v379, 0
        %v388 = vsel %vm383, %v380, 0
        %v391 = vsel %vm383, %v381, 0
        %v394 = vsel %vm383, %v382, 0
        %396 = vmatpush.bf16.msra.mxu0 0
        %397 = vmatpush.bf16.msra.mxu0 0
        %398 = vmatpush.bf16.msra.mxu0 0
        %399 = vmatpush.bf16.msra.mxu0 0
        %400 = vmatpush.bf16.msra.mxu0 %v362
        %401 = vmatpush.bf16.msra.mxu0 %v361
        %402 = vmatpush.bf16.msra.mxu0 %v360
        %403 = vmatpush.bf16.msra.mxu0 %v359
        %404 = vmatmul.bf16.gmra.mxu0 %v385
        %v405 = vpop.f32.mrf.mxu0
        %v406 = vadd.f32 0.0, %v405
        %v407 = vpop.f32.mrf.mxu0
        %v408 = vadd.f32 0.0, %v407
        %409 = vmatmul.bf16.gmra.mxu0 %v388
        %v410 = vpop.f32.mrf.mxu0
        %v411 = vadd.f32 0.0, %v410
        %v412 = vpop.f32.mrf.mxu0
        %v413 = vadd.f32 0.0, %v412
        %414 = vmatmul.bf16.gmra.mxu0 %v391
        %v415 = vpop.f32.mrf.mxu0
        %v416 = vadd.f32 0.0, %v415
        %v417 = vpop.f32.mrf.mxu0
        %v418 = vadd.f32 0.0, %v417
        %419 = vmatmul.bf16.gmra.mxu0 %v394
        %v420 = vpop.f32.mrf.mxu0
        %v421 = vadd.f32 0.0, %v420
        %v422 = vpop.f32.mrf.mxu0
        %v423 = vadd.f32 0.0, %v422
        %424 = vdwg.mxu0
        %v425 = vmul.f32 %v406, 0.0010405828
        %v426 = vmul.f32 %v408, 0.0010405828
        %v427 = vmul.f32 %v411, 0.0010405828
        %v428 = vmul.f32 %v413, 0.0010405828
        %v429 = vmul.f32 %v416, 0.0010405828
        %v430 = vmul.f32 %v418, 0.0010405828
        %v431 = vmul.f32 %v421, 0.0010405828
        %v432 = vmul.f32 %v423, 0.0010405828
        %v433 = vsub.f32 %v425, %v289
        %v434 = vsub.f32 %v426, %v290
        %v435 = vsub.f32 %v427, %v291
        %v436 = vsub.f32 %v428, %v292
        %v437 = vsub.f32 %v429, %v293
        %v438 = vsub.f32 %v430, %v294
        %v439 = vsub.f32 %v431, %v295
        %v440 = vsub.f32 %v432, %v296
        %v441 = vand.u32 2147483647, %v433
        %v442 = vand.u32 2147483647, %v434
        %v443 = vand.u32 2147483647, %v435
        %v444 = vand.u32 2147483647, %v436
        %v445 = vand.u32 2147483647, %v437
        %v446 = vand.u32 2147483647, %v438
        %v447 = vand.u32 2147483647, %v439
        %v448 = vand.u32 2147483647, %v440
        %v449 = vmul.f32 %v441, 5.0
        %v450 = vmul.f32 %v442, 5.0
        %v451 = vmul.f32 %v443, 5.0
        %v452 = vmul.f32 %v444, 5.0
        %v453 = vmul.f32 %v445, 5.0
        %v454 = vmul.f32 %v446, 5.0
        %v455 = vmul.f32 %v447, 5.0
        %v456 = vmul.f32 %v448, 5.0
        %v457 = vadd.f32 %v449, 1.0
        %v458 = vadd.f32 %v450, 1.0
        %v459 = vadd.f32 %v451, 1.0
        %v460 = vadd.f32 %v452, 1.0
        %v461 = vadd.f32 %v453, 1.0
        %v462 = vadd.f32 %v454, 1.0
        %v463 = vadd.f32 %v455, 1.0
        %v464 = vadd.f32 %v456, 1.0
        %v465 = vand.u32 2147483647, %v281
        %v466 = vand.u32 2147483647, %v282
        %v467 = vand.u32 2147483647, %v283
        %v468 = vand.u32 2147483647, %v284
        %v469 = vand.u32 2147483647, %v285
        %v470 = vand.u32 2147483647, %v286
        %v471 = vand.u32 2147483647, %v287
        %v472 = vand.u32 2147483647, %v288
        %v473 = vsub.f32 0.0, %v465
        %v474 = vsub.f32 0.0, %v466
        %v475 = vsub.f32 0.0, %v467
        %v476 = vsub.f32 0.0, %v468
        %v477 = vsub.f32 0.0, %v469
        %v478 = vsub.f32 0.0, %v470
        %v479 = vsub.f32 0.0, %v471
        %v480 = vsub.f32 0.0, %v472
        %v481 = vmul.f32 %v473, 1.442695
        %v482 = vpow.pop %v481
        %v483 = vmul.f32 %v474, 1.442695
        %v484 = vpow.pop %v483
        %v485 = vmul.f32 %v475, 1.442695
        %v486 = vpow.pop %v485
        %v487 = vmul.f32 %v476, 1.442695
        %v488 = vpow.pop %v487
        %v489 = vmul.f32 %v477, 1.442695
        %v490 = vpow.pop %v489
        %v491 = vmul.f32 %v478, 1.442695
        %v492 = vpow.pop %v491
        %v493 = vmul.f32 %v479, 1.442695
        %v494 = vpow.pop %v493
        %v495 = vmul.f32 %v480, 1.442695
        %v496 = vpow.pop %v495
        %v497 = vmax.f32 %v281, 0.0
        %v498 = vmax.f32 %v282, 0.0
        %v499 = vmax.f32 %v283, 0.0
        %v500 = vmax.f32 %v284, 0.0
        %v501 = vmax.f32 %v285, 0.0
        %v502 = vmax.f32 %v286, 0.0
        %v503 = vmax.f32 %v287, 0.0
        %v504 = vmax.f32 %v288, 0.0
        %v505 = vmul.f32 %v281, %v289
        %v506 = vmul.f32 %v282, %v290
        %v507 = vmul.f32 %v283, %v291
        %v508 = vmul.f32 %v284, %v292
        %v509 = vmul.f32 %v285, %v293
        %v510 = vmul.f32 %v286, %v294
        %v511 = vmul.f32 %v287, %v295
        %v512 = vmul.f32 %v288, %v296
        %v513 = vsub.f32 %v497, %v505
        %v514 = vsub.f32 %v498, %v506
        %v515 = vsub.f32 %v499, %v507
        %v516 = vsub.f32 %v500, %v508
        %v517 = vsub.f32 %v501, %v509
        %v518 = vsub.f32 %v502, %v510
        %v519 = vsub.f32 %v503, %v511
        %v520 = vsub.f32 %v504, %v512
        %v521 = vadd.f32 %v482, 1.0
        %v522 = vadd.f32 %v484, 1.0
        %v523 = vadd.f32 %v486, 1.0
        %v524 = vadd.f32 %v488, 1.0
        %v525 = vadd.f32 %v490, 1.0
        %v526 = vadd.f32 %v492, 1.0
        %v527 = vadd.f32 %v494, 1.0
        %v528 = vadd.f32 %v496, 1.0
        %v529 = vlog2.pop %v521
        %v530 = vmul.f32 %v529, 0.6931472
        %v531 = vlog2.pop %v522
        %v532 = vmul.f32 %v531, 0.6931472
        %v533 = vlog2.pop %v523
        %v534 = vmul.f32 %v533, 0.6931472
        %v535 = vlog2.pop %v524
        %v536 = vmul.f32 %v535, 0.6931472
        %v537 = vlog2.pop %v525
        %v538 = vmul.f32 %v537, 0.6931472
        %v539 = vlog2.pop %v526
        %v540 = vmul.f32 %v539, 0.6931472
        %v541 = vlog2.pop %v527
        %v542 = vmul.f32 %v541, 0.6931472
        %v543 = vlog2.pop %v528
        %v544 = vmul.f32 %v543, 0.6931472
        %v545 = vadd.f32 %v513, %v530
        %v546 = vadd.f32 %v514, %v532
        %v547 = vadd.f32 %v515, %v534
        %v548 = vadd.f32 %v516, %v536
        %v549 = vadd.f32 %v517, %v538
        %v550 = vadd.f32 %v518, %v540
        %v551 = vadd.f32 %v519, %v542
        %v552 = vadd.f32 %v520, %v544
        %v553 = vrcp.pop %v521
        %v554 = vmul.f32 %v521, %v553
        %v555 = vsub.f32 1.0, %v554
        %v556 = vmul.f32 %v553, %v555
        %v557 = vadd.f32 %v553, %v556
        %vm558 = vweird.f32 %v521
        %vm559 = vweird.f32 %v553
        %vm560 = vmor %vm558, %vm559
        %v561 = vsel %vm560, %v553, %v557
        %v562 = vand.u32 2147483647, %v521
        %vm563 = vcmp.eq.f32.partialorder %v562, 8.507059e+37
        %v564 = vand.u32 %v521, 2147483648
        %v565 = vor.u32 1.1754944e-38, %v564
        %v566 = vsel %vm563, %v565, %v561
        %v567 = vmul.f32 1.0, %v566
        %v568 = vrcp.pop %v522
        %v569 = vmul.f32 %v522, %v568
        %v570 = vsub.f32 1.0, %v569
        %v571 = vmul.f32 %v568, %v570
        %v572 = vadd.f32 %v568, %v571
        %vm573 = vweird.f32 %v522
        %vm574 = vweird.f32 %v568
        %vm575 = vmor %vm573, %vm574
        %v576 = vsel %vm575, %v568, %v572
        %v577 = vand.u32 2147483647, %v522
        %vm578 = vcmp.eq.f32.partialorder %v577, 8.507059e+37
        %v579 = vand.u32 %v522, 2147483648
        %v580 = vor.u32 1.1754944e-38, %v579
        %v581 = vsel %vm578, %v580, %v576
        %v582 = vmul.f32 1.0, %v581
        %v583 = vrcp.pop %v523
        %v584 = vmul.f32 %v523, %v583
        %v585 = vsub.f32 1.0, %v584
        %v586 = vmul.f32 %v583, %v585
        %v587 = vadd.f32 %v583, %v586
        %vm588 = vweird.f32 %v523
        %vm589 = vweird.f32 %v583
        %vm590 = vmor %vm588, %vm589
        %v591 = vsel %vm590, %v583, %v587
        %v592 = vand.u32 2147483647, %v523
        %vm593 = vcmp.eq.f32.partialorder %v592, 8.507059e+37
        %v594 = vand.u32 %v523, 2147483648
        %v595 = vor.u32 1.1754944e-38, %v594
        %v596 = vsel %vm593, %v595, %v591
        %v597 = vmul.f32 1.0, %v596
        %v598 = vrcp.pop %v524
        %v599 = vmul.f32 %v524, %v598
        %v600 = vsub.f32 1.0, %v599
        %v601 = vmul.f32 %v598, %v600
        %v602 = vadd.f32 %v598, %v601
        %vm603 = vweird.f32 %v524
        %vm604 = vweird.f32 %v598
        %vm605 = vmor %vm603, %vm604
        %v606 = vsel %vm605, %v598, %v602
        %v607 = vand.u32 2147483647, %v524
        %vm608 = vcmp.eq.f32.partialorder %v607, 8.507059e+37
        %v609 = vand.u32 %v524, 2147483648
        %v610 = vor.u32 1.1754944e-38, %v609
        %v611 = vsel %vm608, %v610, %v606
        %v612 = vmul.f32 1.0, %v611
        %v613 = vrcp.pop %v525
        %v614 = vmul.f32 %v525, %v613
        %v615 = vsub.f32 1.0, %v614
        %v616 = vmul.f32 %v613, %v615
        %v617 = vadd.f32 %v613, %v616
        %vm618 = vweird.f32 %v525
        %vm619 = vweird.f32 %v613
        %vm620 = vmor %vm618, %vm619
        %v621 = vsel %vm620, %v613, %v617
        %v622 = vand.u32 2147483647, %v525
        %vm623 = vcmp.eq.f32.partialorder %v622, 8.507059e+37
        %v624 = vand.u32 %v525, 2147483648
        %v625 = vor.u32 1.1754944e-38, %v624
        %v626 = vsel %vm623, %v625, %v621
        %v627 = vmul.f32 1.0, %v626
        %v628 = vrcp.pop %v526
        %v629 = vmul.f32 %v526, %v628
        %v630 = vsub.f32 1.0, %v629
        %v631 = vmul.f32 %v628, %v630
        %v632 = vadd.f32 %v628, %v631
        %vm633 = vweird.f32 %v526
        %vm634 = vweird.f32 %v628
        %vm635 = vmor %vm633, %vm634
        %v636 = vsel %vm635, %v628, %v632
        %v637 = vand.u32 2147483647, %v526
        %vm638 = vcmp.eq.f32.partialorder %v637, 8.507059e+37
        %v639 = vand.u32 %v526, 2147483648
        %v640 = vor.u32 1.1754944e-38, %v639
        %v641 = vsel %vm638, %v640, %v636
        %v642 = vmul.f32 1.0, %v641
        %v643 = vrcp.pop %v527
        %v644 = vmul.f32 %v527, %v643
        %v645 = vsub.f32 1.0, %v644
        %v646 = vmul.f32 %v643, %v645
        %v647 = vadd.f32 %v643, %v646
        %vm648 = vweird.f32 %v527
        %vm649 = vweird.f32 %v643
        %vm650 = vmor %vm648, %vm649
        %v651 = vsel %vm650, %v643, %v647
        %v652 = vand.u32 2147483647, %v527
        %vm653 = vcmp.eq.f32.partialorder %v652, 8.507059e+37
        %v654 = vand.u32 %v527, 2147483648
        %v655 = vor.u32 1.1754944e-38, %v654
        %v656 = vsel %vm653, %v655, %v651
        %v657 = vmul.f32 1.0, %v656
        %v658 = vrcp.pop %v528
        %v659 = vmul.f32 %v528, %v658
        %v660 = vsub.f32 1.0, %v659
        %v661 = vmul.f32 %v658, %v660
        %v662 = vadd.f32 %v658, %v661
        %vm663 = vweird.f32 %v528
        %vm664 = vweird.f32 %v658
        %vm665 = vmor %vm663, %vm664
        %v666 = vsel %vm665, %v658, %v662
        %v667 = vand.u32 2147483647, %v528
        %vm668 = vcmp.eq.f32.partialorder %v667, 8.507059e+37
        %v669 = vand.u32 %v528, 2147483648
        %v670 = vor.u32 1.1754944e-38, %v669
        %v671 = vsel %vm668, %v670, %v666
        %v672 = vmul.f32 1.0, %v671
        %vm673 = vcmp.ge.f32.partialorder %v281, 0.0
        %vm674 = vcmp.ge.f32.partialorder %v282, 0.0
        %vm675 = vcmp.ge.f32.partialorder %v283, 0.0
        %vm676 = vcmp.ge.f32.partialorder %v284, 0.0
        %vm677 = vcmp.ge.f32.partialorder %v285, 0.0
        %vm678 = vcmp.ge.f32.partialorder %v286, 0.0
        %vm679 = vcmp.ge.f32.partialorder %v287, 0.0
        %vm680 = vcmp.ge.f32.partialorder %v288, 0.0
        %v681 = vmul.f32 %v482, %v567
        %v682 = vmul.f32 %v484, %v582
        %v683 = vmul.f32 %v486, %v597
        %v684 = vmul.f32 %v488, %v612
        %v685 = vmul.f32 %v490, %v627
        %v686 = vmul.f32 %v492, %v642
        %v687 = vmul.f32 %v494, %v657
        %v688 = vmul.f32 %v496, %v672
        %v689 = vsel %vm673, %v567, %v681
        %v690 = vsel %vm674, %v582, %v682
        %v691 = vsel %vm675, %v597, %v683
        %v692 = vsel %vm676, %v612, %v684
        %v693 = vsel %vm677, %v627, %v685
        %v694 = vsel %vm678, %v642, %v686
        %v695 = vsel %vm679, %v657, %v687
        %v696 = vsel %vm680, %v672, %v688
        %s697 = sadd.s32 %s23, %s24
        %s698 = smul.u32 %s697, 4
        %v699 = vlaneseq
        %v700 = vshrl.u32 %v699, 7
        %v701 = vadd.s32 %v700, 8
        %v702 = vadd.s32 %v700, 16
        %v703 = vadd.s32 %v700, 24
        %v704 = vadd.s32 %v700, 32
        %v705 = vadd.s32 %v700, 40
        %v706 = vadd.s32 %v700, 48
        %v707 = vadd.s32 %v700, 56
        %s708 = smul.u32 %s697, 64
        %v709 = vstv %s708
        %v710 = vadd.s32 %v709, %v700
        %v711 = vadd.s32 %v709, %v701
        %v712 = vadd.s32 %v709, %v702
        %v713 = vadd.s32 %v709, %v703
        %v714 = vadd.s32 %v709, %v704
        %v715 = vadd.s32 %v709, %v705
        %v716 = vadd.s32 %v709, %v706
        %v717 = vadd.s32 %v709, %v707
        %vm718 = vcmp.lt.s32.totalorder %v710, 128
        %vm719 = vcmp.lt.s32.totalorder %v711, 128
        %vm720 = vcmp.lt.s32.totalorder %v712, 128
        %vm721 = vcmp.lt.s32.totalorder %v713, 128
        %vm722 = vcmp.lt.s32.totalorder %v714, 128
        %vm723 = vcmp.lt.s32.totalorder %v715, 128
        %vm724 = vcmp.lt.s32.totalorder %v716, 128
        %vm725 = vcmp.lt.s32.totalorder %v717, 128
        %v726 = vsel %vm718, 1, 0
        %v727 = vsel %vm719, 1, 0
        %v728 = vsel %vm720, 1, 0
        %v729 = vsel %vm721, 1, 0
        %v730 = vsel %vm722, 1, 0
        %v731 = vsel %vm723, 1, 0
        %v732 = vsel %vm724, 1, 0
        %v733 = vsel %vm725, 1, 0
        %v734 = vcvt.s32.f32 %v726
        %v735 = vcvt.s32.f32 %v727
        %v736 = vcvt.s32.f32 %v728
        %v737 = vcvt.s32.f32 %v729
        %v738 = vcvt.s32.f32 %v730
        %v739 = vcvt.s32.f32 %v731
        %v740 = vcvt.s32.f32 %v732
        %v741 = vcvt.s32.f32 %v733
        %v742 = vstv %s698
        %v743 = vadd.s32 %v742, %v700
        %vm744 = vcmp.lt.s32.totalorder %v743, 8
        %v745 = vld [vmem:[#allocation2] sm:$0x1]
        %v746 = vmul.f32 %v545, %v734
        %v747 = vmul.f32 %v546, %v735
        %v748 = vmul.f32 %v547, %v736
        %v749 = vmul.f32 %v548, %v737
        %v750 = vmul.f32 %v549, %v738
        %v751 = vmul.f32 %v550, %v739
        %v752 = vmul.f32 %v551, %v740
        %v753 = vmul.f32 %v552, %v741
        %v754 = vsel %vm309, %v746, 0.0
        %v755 = vsel %vm309, %v747, 0.0
        %v756 = vadd.f32 %v754, %v755
        %v757 = vsel %vm309, %v748, 0.0
        %v758 = vadd.f32 %v756, %v757
        %v759 = vsel %vm309, %v749, 0.0
        %v760 = vadd.f32 %v758, %v759
        %v761 = vsel %vm309, %v750, 0.0
        %v762 = vadd.f32 %v760, %v761
        %v763 = vsel %vm309, %v751, 0.0
        %v764 = vadd.f32 %v762, %v763
        %v765 = vsel %vm309, %v752, 0.0
        %v766 = vadd.f32 %v764, %v765
        %v767 = vsel %vm309, %v753, 0.0
        %v768 = vadd.f32 %v766, %v767
        %769 = vadd.xlane.f32.xlu0 %v768
        %v770 = vpop.xlane.xlu0 %769
        %v771 = vrot.slane %v770, 4
        %v772 = vadd.f32 %v770, %v771
        %v773 = vrot.slane %v772, 2
        %v774 = vadd.f32 %v772, %v773
        %v775 = vrot.slane %v774, 1
        %v776 = vadd.f32 %v774, %v775
        %s777 = vtos %v776
        %v778 = vstv %s777
        %v779 = vadd.f32 %v745, %v778
        %vm780 = vcmask 0
        %781 = vst.msk [vmem:[#allocation2] sm:$0x1] %vm780, %v779
        %v782 = vld [vmem:[%s4] sm:$0xf]
        %v783 = vmul.f32 %v689, %v289
        %v784 = vmul.f32 %v690, %v290
        %v785 = vmul.f32 %v691, %v291
        %v786 = vmul.f32 %v692, %v292
        %v787 = vmul.f32 %v693, %v293
        %v788 = vmul.f32 %v694, %v294
        %v789 = vmul.f32 %v695, %v295
        %v790 = vmul.f32 %v696, %v296
        %v791 = vmul.f32 %v783, %v457
        %v792 = vmul.f32 %v784, %v458
        %v793 = vmul.f32 %v785, %v459
        %v794 = vmul.f32 %v786, %v460
        %v795 = vmul.f32 %v787, %v461
        %v796 = vmul.f32 %v788, %v462
        %v797 = vmul.f32 %v789, %v463
        %v798 = vmul.f32 %v790, %v464
        %v800 = vsel %vm383, %v782, 0
        %802 = vmatpush.msra.mxu0 0.0
        %803 = vmatpush.msra.mxu0 0.0
        %804 = vmatpush.msra.mxu0 0.0
        %805 = vmatpush.msra.mxu0 0.0
        %806 = vmatpush.msra.mxu0 0.0
        %807 = vmatpush.msra.mxu0 0.0
        %808 = vmatpush.msra.mxu0 0.0
        %809 = vmatpush.msra.mxu0 0.0
        %810 = vmatpush.msra.mxu0 %v798
        %811 = vmatpush.msra.mxu0 %v797
        %812 = vmatpush.msra.mxu0 %v796
        %813 = vmatpush.msra.mxu0 %v795
        %814 = vmatpush.msra.mxu0 %v794
        %815 = vmatpush.msra.mxu0 %v793
        %816 = vmatpush.msra.mxu0 %v792
        %817 = vmatpush.msra.mxu0 %v791
        %818 = vmatmul.f32.gmra.mxu0 %v800
        %v819 = vpop.f32.mrf.mxu0
        %v820 = vadd.f32 0.0, %v819
        %821 = vdwg.mxu0
        %vm822 = vcmask 125952
        %v823 = vsel %vm822, %v820, 0.0
        %824 = vadd.xlane.f32.xlu0 %v823
        %v825 = vpop.xlane.xlu0 %824
        %v826 = vadd.f32 %v689, %v289
        %v827 = vadd.f32 %v690, %v290
        %v828 = vadd.f32 %v691, %v291
        %v829 = vadd.f32 %v692, %v292
        %v830 = vadd.f32 %v693, %v293
        %v831 = vadd.f32 %v694, %v294
        %v832 = vadd.f32 %v695, %v295
        %v833 = vadd.f32 %v696, %v296
        %v834 = vmul.f32 %v826, %v457
        %v835 = vmul.f32 %v827, %v458
        %v836 = vmul.f32 %v828, %v459
        %v837 = vmul.f32 %v829, %v460
        %v838 = vmul.f32 %v830, %v461
        %v839 = vmul.f32 %v831, %v462
        %v840 = vmul.f32 %v832, %v463
        %v841 = vmul.f32 %v833, %v464
        %842 = vmatpush.msra.mxu0 0.0
        %843 = vmatpush.msra.mxu0 0.0
        %844 = vmatpush.msra.mxu0 0.0
        %845 = vmatpush.msra.mxu0 0.0
        %846 = vmatpush.msra.mxu0 0.0
        %847 = vmatpush.msra.mxu0 0.0
        %848 = vmatpush.msra.mxu0 0.0
        %849 = vmatpush.msra.mxu0 0.0
        %850 = vmatpush.msra.mxu0 %v841
        %851 = vmatpush.msra.mxu0 %v840
        %852 = vmatpush.msra.mxu0 %v839
        %853 = vmatpush.msra.mxu0 %v838
        %854 = vmatpush.msra.mxu0 %v837
        %855 = vmatpush.msra.mxu0 %v836
        %856 = vmatpush.msra.mxu0 %v835
        %857 = vmatpush.msra.mxu0 %v834
        %858 = vmatmul.f32.gmra.mxu0 %v800
        %v859 = vpop.f32.mrf.mxu0
        %v860 = vadd.f32 0.0, %v859
        %861 = vdwg.mxu0
        %v862 = vsel %vm822, %v860, 0.0
        %863 = vadd.xlane.f32.xlu0 %v862
        %v864 = vpop.xlane.xlu0 %863
        %v865 = vsub.f32 %v864, %v825
        %v866 = vrcp.pop %v865
        %v867 = vmul.f32 %v865, %v866
        %v868 = vsub.f32 1.0, %v867
        %v869 = vmul.f32 %v866, %v868
        %v870 = vadd.f32 %v866, %v869
        %vm871 = vweird.f32 %v865
        %vm872 = vweird.f32 %v866
        %vm873 = vmor %vm871, %vm872
        %v874 = vsel %vm873, %v866, %v870
        %v875 = vand.u32 2147483647, %v865
        %vm876 = vcmp.eq.f32.partialorder %v875, 8.507059e+37
        %v877 = vand.u32 %v865, 2147483648
        %v878 = vor.u32 1.1754944e-38, %v877
        %v879 = vsel %vm876, %v878, %v874
        %v880 = vmul.f32 %v825, %v879
        %v881 = vsub.f32 1.0, %v880
        %v882 = vld [vmem:[#allocation3] sm:$0x1]
        %v883 = vsel %vm744, %v881, 0.0
        %vm884 = vcmask 3072
        %v885 = vsel %vm884, %v883, 0.0
        %886 = vadd.xlane.f32.xlu0 %v885
        %v887 = vpop.xlane.xlu0 %886
        %v888 = vrot.slane %v887, 4
        %v889 = vadd.f32 %v887, %v888
        %v890 = vrot.slane %v889, 2
        %v891 = vadd.f32 %v889, %v890
        %v892 = vrot.slane %v891, 1
        %v893 = vadd.f32 %v891, %v892
        %s894 = vtos %v893
        %v895 = vstv %s894
        %v896 = vadd.f32 %v882, %v895
        %897 = vst.msk [vmem:[#allocation3] sm:$0x1] %vm780, %v896
        // Predicated region
        $region45: #{tpu_custom_call.1} parent=39 // pred_check
          %p898 = pneg %p274
        $region46: #{tpu_custom_call.1} parent=39 // pred_check_branch
          %900 = sbr.rel (%p898) target = $region48
        $region47: #{tpu_custom_call.1} parent=39 // pred_region
          %v901 = vld [vmem:[#allocation2] sm:$0x1]
          %v902 = vmul.f32 %v901, 0.00048828125
          %v903 = vld [vmem:[#allocation3] sm:$0x1]
          %v904 = vmul.f32 %v903, 0.125
          %v905 = vadd.f32 %v902, %v904
          %v907 = vperm.slane %v905, 0
          %908 = vset.pattern.permute.xlu0 0
          %909 = vperm.xlu0 %908, %v907
          %v910 = vpop.permute.xlu0 %909
          %912 = vst [vmem:[%s256] sm:$0xff] %v910
        $region48: #{tpu_custom_call.1} parent=39 // pred_fallthru
          _
        %s913 = sand.u32 %s158, 1
        %s914 = scalar_lea.sflag [#allocation5], %s913
        %s915 = sand.u32 %s158, 1
        %s916 = smul.addr %s915, 8
        %s917 = scalar_lea.vmem [#allocation4], %s916
        // Predicated region
        $region49: #{tpu_custom_call.1} parent=39 // pred_check
          %p918 = pneg %p168
        $region50: #{tpu_custom_call.1} parent=39 // pred_check_branch
          %920 = sbr.rel (%p918) target = $region52
        $region51: #{tpu_custom_call.1} parent=39 // pred_region
          %922 = vsyncadd %s914, 0
          %s923 = smul.addr %s23, 8
          %s924 = scalar_lea.hbm %s5, %s923
          %s926 = sshll.u32 %s917, 4
          %s927 = int_to_ptr.vmem [resolvable:$true] %s926
          %s928 = sshll.u32 %s924, 4
          %s929 = int_to_ptr.hbm [resolvable:$true] %s928
          %931 = dma.vmem_to_hbm [thread:$0]  %s927, 128, %s929, %s914
        $region52: #{tpu_custom_call.1} parent=39 // pred_fallthru
          _
      $region40: #{tpu_custom_call.1} parent=5 // pred_fallthru
        _
      %p932 = scmp.le.s32.totalorder 2, %s14
      // Predicated region
      $region53: #{tpu_custom_call.1} parent=5 // pred_check
        %p933 = pneg %p932
      $region54: #{tpu_custom_call.1} parent=5 // pred_check_branch
        %935 = sbr.rel (%p933) target = $region56
      $region55: #{tpu_custom_call.1} parent=5 // pred_region
        %s936 = ssub.s32 %s14, 2
        // Predicated region
        $region57: #{tpu_custom_call.1} parent=55 // pred_check
          %p937 = pneg %p174
        $region58: #{tpu_custom_call.1} parent=55 // pred_check_branch
          %939 = sbr.rel (%p937) target = $region60
        $region59: #{tpu_custom_call.1} parent=55 // pred_region
          %s940 = sand.u32 %s159, 1
          %s941 = scalar_lea.sflag [#allocation5], %s940
          %s942 = sand.u32 %s159, 1
          %s943 = smul.addr %s942, 8
          %s944 = scalar_lea.vmem [#allocation4], %s943
          %946 = dma.done %s941, 128
        $region60: #{tpu_custom_call.1} parent=55 // pred_fallthru
          _
      $region56: #{tpu_custom_call.1} parent=5 // pred_fallthru
        _
    $region6: #{tpu_custom_call.1} parent=1 // loop_footer
      %s18 = sadd.s32 1, %s14
    $region7: #{tpu_custom_call.1} parent=1 // loop_footer_branch
      %13 = sbr.rel target = $region3
    $region8: #{tpu_custom_call.1} parent=1 // loop_exit
      _
    %947 = vsyncpa [#allocation5], 1
    %s948 = scalar_lea.sflag [#allocation5], 1
    %949 = vsyncpa %s948, 1

</llo_original>
